<compile_context>
chip_gen: v6e
topology: v6e:2x2x1
jax: 0.10.0
libtpu: 0.0.40
codegen_flags: <defaults>
</compile_context>

<pallas_src>
import math
from functools import partial

import jax
import jax.numpy as jnp
from jax.experimental import pallas as pl
from jax.experimental.pallas import tpu as pltpu


def _round_up(x, m):
    return ((x + m - 1) // m) * m


def _make_dl_kernel(num_layers):
    """Kernel for: [Linear + LeakyReLU(0.2)] * (num_layers-1) -> Linear(., 1) -> Sigmoid."""

    def kernel(*refs):
        x_ref = refs[0]
        o_ref = refs[-1]
        wb = refs[1:-1]                        # (w0, b0, w1, b1, ..., wT, bT)

        h = x_ref[...].astype(jnp.float32)     # (TILE_B, nz)

        # Hidden layers: bf16 MXU matmul, f32 accumulate, f32 LeakyReLU.
        for l in range(num_layers - 1):
            w = wb[2 * l][...]                 # (fan_in, fan_out) bf16, resident
            b = wb[2 * l + 1][...]             # (1, fan_out) f32
            h = jnp.dot(h.astype(jnp.bfloat16), w,
                        preferred_element_type=jnp.float32) + b
            h = jnp.where(h > 0, h, 0.2 * h)

        # Final (fan_in -> 1) layer computed transposed for a lane-dense store:
        #   logits^T = W^T (1, fan_in) . h^T  ->  (1, TILE_B)
        wt = wb[-2][...]                       # (1, fan_in) f32 (pre-transposed)
        bt = wb[-1][...]                       # (1, 1) f32
        logits = jax.lax.dot_general(
            wt, h,
            dimension_numbers=(((1,), (1,)), ((), ())),
            preferred_element_type=jnp.float32) + bt          # (1, TILE_B)

        # Exact sigmoid (EUP exp + exact divide) -> guaranteed within [0, 1].
        sig = 1.0 / (1.0 + jnp.exp(-logits))
        o_ref[...] = sig[None]                 # (1, 1, TILE_B) lane-dense store

    return kernel


def prepare_dl_params(params):
    """One-time parameter preprocessing (hoisted out of the per-step forward).

    params: list of (W (fan_in, fan_out), b (fan_out,)) per Linear layer
            (W stored input-major, i.e. the transpose of nn.Linear.weight).
    Returns a flat tuple (w0, b0, w1, b1, ..., wT, bT) ready for dl_forward:
      hidden W in bf16, final W transposed to (1, fan_in) f32, biases (1, fan_out) f32.
    """
    n = len(params)
    ops = []
    for li, (W, b) in enumerate(params):
        if li < n - 1:
            Wk = jnp.asarray(W, jnp.bfloat16)                 # (fan_in, fan_out)
        else:
            Wk = jnp.asarray(W, jnp.float32).T                # (1, fan_in), transposed
        bk = jnp.asarray(b, jnp.float32).reshape(1, -1)       # (1, fan_out)
        ops += [Wk, bk]
    return tuple(ops)


@partial(jax.jit, static_argnames=("tile_cap",))
def dl_forward(x, ops, *, tile_cap=8192):
    """Forward pass of Dl.

    x:   (B, ...) array; flattened to (B, nz) like PyTorch's x.view(B, -1).
         For best HBM bandwidth, pass bf16 directly from the producer.
    ops: flat tuple from prepare_dl_params().
    Returns: (B,) float32 in [0, 1].
    """
    B = x.shape[0]
    x2 = x.reshape(B, -1)
    nz = x2.shape[1]
    num_layers = len(ops) // 2

    # Tile selection: large tiles to amortize per-step overhead, but keep
    # grid_b >= ~4 when the batch allows so v7x megacore can split the
    # "parallel" batch axis. Tile is a multiple of 8 (sublane constraint).
    tile = min(int(tile_cap), max(8, _round_up(pl.cdiv(B, 4), 8)))
    grid_b = pl.cdiv(B, tile)   # partial last block allowed; no jnp.pad copy.

    in_specs = [pl.BlockSpec((tile, nz), lambda i: (i, 0))]
    for op in ops:
        # Constant block index -> parameters are DMA'd once and stay resident.
        in_specs.append(pl.BlockSpec(op.shape, lambda i: (0, 0)))

    # Raise the scoped-VMEM limit only if a big user tile would exceed the
    # v5e default (16 MiB); default tiles stay well under it on all chips.
    param_bytes = sum(int(o.size) * o.dtype.itemsize for o in ops)
    needed = (2 * tile * nz * x2.dtype.itemsize   # double-buffered input tiles
              + 2 * tile * 4                      # double-buffered output tiles
              + 2 * param_bytes
              + (2 << 20))                        # headroom
    vmem_limit = int(max(needed, 32 << 20)) if needed > (16 << 20) else None

    out = pl.pallas_call(
        _make_dl_kernel(num_layers),
        grid=(grid_b,),
        in_specs=in_specs,
        out_specs=pl.BlockSpec((1, 1, tile), lambda i: (i, 0, 0)),
        out_shape=jax.ShapeDtypeStruct((grid_b, 1, tile), jnp.float32),
        compiler_params=pltpu.CompilerParams(
            dimension_semantics=("parallel",),
            vmem_limit_bytes=vmem_limit),
    )(x2, *ops)

    # PyTorch forward does x.squeeze(1) -> (B,).  Rows >= B of the last tile were
    # computed from unread (garbage) input rows; each output row depends only on
    # its own input row, so slicing them off is safe.  Keep that invariant.
    return out.reshape(grid_b * tile)[:B]


def init_dl_params(nz, key):
    """Deterministic init mimicking nn.Linear default U[-1/sqrt(fan_in), +1/sqrt(fan_in)]."""
    dims = []
    cn = nz
    while cn > 16:
        dims.append((cn, cn // 2))
        cn //= 2
    dims.append((cn, 1))

    params = []
    for fan_in, fan_out in dims:
        key, kw, kb = jax.random.split(key, 3)
        bound = 1.0 / math.sqrt(fan_in)
        W = jax.random.uniform(kw, (fan_in, fan_out), jnp.float32, -bound, bound)
        b = jax.random.uniform(kb, (fan_out,), jnp.float32, -bound, bound)
        params.append((W, b))
    return params


def dl_reference(x, params):
    """Pure-JAX reference mimicking the kernel's numerics (bf16 hidden matmuls)."""
    h = x.reshape(x.shape[0], -1).astype(jnp.float32)
    n = len(params)
    for i, (W, b) in enumerate(params):
        if i < n - 1:
            h = jnp.dot(h.astype(jnp.bfloat16), W.astype(jnp.bfloat16),
                        preferred_element_type=jnp.float32) + b.reshape(1, -1)
            h = jnp.where(h > 0, h, 0.2 * h)
        else:
            h = jnp.dot(h, W.astype(jnp.float32),
                        preferred_element_type=jnp.float32) + b.reshape(1, -1)
    return jax.nn.sigmoid(h).reshape(-1)


if __name__ == "__main__":
    nz = 64
    batch = 8

    key = jax.random.PRNGKey(0)
    key, kx = jax.random.split(key)
    # Typical OCGAN latent shape (B, nz, 1, 1); forward flattens it.
    x = jax.random.normal(kx, (batch, nz, 1, 1), jnp.float32)
    params = init_dl_params(nz, key)
    ops = prepare_dl_params(params)

    y = dl_forward(x, ops)
    jax.block_until_ready(y)
    assert y.shape == (batch,), y.shape
    assert bool(jnp.all((y >= 0.0) & (y <= 1.0)))

    y_ref = dl_reference(x, params)
    assert bool(jnp.allclose(y, y_ref, atol=1e-2)), float(jnp.max(jnp.abs(y - y_ref)))

    # Multi-tile path: non-tile-aligned batch (partial last block, no pad copy),
    # bf16 producer input, resident weights reused per tile, grid_b >= 2.
    key, kx2 = jax.random.split(key)
    xb = jax.random.normal(kx2, (200, nz), jnp.float32).astype(jnp.bfloat16)
    yb = dl_forward(xb, ops, tile_cap=64)
    jax.block_until_ready(yb)
    assert yb.shape == (200,), yb.shape
    assert bool(jnp.all((yb >= 0.0) & (yb <= 1.0)))
    yb_ref = dl_reference(xb, params)
    assert bool(jnp.allclose(yb, yb_ref, atol=1e-2)), float(jnp.max(jnp.abs(yb - yb_ref)))

    print("KERNEL_OK")
</pallas_src>

<mosaic_0001>
module attributes {stable_mosaic.version = 11 : i64} {
  func.func @kernel(%arg0: i32, %arg1: memref<8x64xf32, #tpu.memory_space<vmem>>, %arg2: memref<64x32xbf16, #tpu.memory_space<vmem>>, %arg3: memref<1x32xf32, #tpu.memory_space<vmem>>, %arg4: memref<32x16xbf16, #tpu.memory_space<vmem>>, %arg5: memref<1x16xf32, #tpu.memory_space<vmem>>, %arg6: memref<1x16xf32, #tpu.memory_space<vmem>>, %arg7: memref<1x1xf32, #tpu.memory_space<vmem>>, %arg8: memref<1x1x8xf32, #tpu.memory_space<vmem>>) attributes {dimension_semantics = [#tpu.dimension_semantics<parallel>], iteration_bounds = array<i64: 1>, scalar_prefetch = 0 : i64, scratch_operands = 0 : i64, tpu.core_type = #tpu.core_type<tc>, window_params = [{transform_indices = @transform_0, window_bounds = array<i64: 8, 64>}, {pipeline_mode = #tpu.pipeline_mode<synchronous>, transform_indices = @transform_1, window_bounds = array<i64: 64, 32>}, {pipeline_mode = #tpu.pipeline_mode<synchronous>, transform_indices = @transform_2, window_bounds = array<i64: 1, 32>}, {pipeline_mode = #tpu.pipeline_mode<synchronous>, transform_indices = @transform_3, window_bounds = array<i64: 32, 16>}, {pipeline_mode = #tpu.pipeline_mode<synchronous>, transform_indices = @transform_4, window_bounds = array<i64: 1, 16>}, {pipeline_mode = #tpu.pipeline_mode<synchronous>, transform_indices = @transform_5, window_bounds = array<i64: 1, 16>}, {pipeline_mode = #tpu.pipeline_mode<synchronous>, transform_indices = @transform_6, window_bounds = array<i64: 1, 1>}, {transform_indices = @transform_7, window_bounds = array<i64: 1, 1, 8>}]} {
    %c0 = arith.constant 0 : index
    %c0_0 = arith.constant 0 : index
    %0 = vector.load %arg1[%c0, %c0_0] : memref<8x64xf32, #tpu.memory_space<vmem>>, vector<8x64xf32>
    %c0_1 = arith.constant 0 : index
    %c0_2 = arith.constant 0 : index
    %1 = vector.load %arg2[%c0_1, %c0_2] : memref<64x32xbf16, #tpu.memory_space<vmem>>, vector<64x32xbf16>
    %c0_3 = arith.constant 0 : index
    %c0_4 = arith.constant 0 : index
    %2 = vector.load %arg3[%c0_3, %c0_4] : memref<1x32xf32, #tpu.memory_space<vmem>>, vector<1x32xf32>
    %3 = arith.truncf %0 : vector<8x64xf32> to vector<8x64xbf16>
    %cst = arith.constant dense<0.000000e+00> : vector<8x32xf32>
    %4 = tpu.matmul %3, %1, %cst {dimension_numbers = #tpu.dot_dimension_numbers<[1], [0], [0], [1], [0, 0, 1, 1], [], []>} : vector<8x64xbf16>, vector<64x32xbf16>, vector<8x32xf32> -> vector<8x32xf32>
    %5 = vector.broadcast %2 : vector<1x32xf32> to vector<8x32xf32>
    %6 = arith.addf %4, %5 : vector<8x32xf32>
    %cst_5 = arith.constant 0.000000e+00 : f32
    %7 = vector.broadcast %cst_5 : f32 to vector<8x32xf32>
    %8 = arith.cmpf ogt, %6, %7 : vector<8x32xf32>
    %cst_6 = arith.constant 2.000000e-01 : f32
    %9 = vector.broadcast %cst_6 : f32 to vector<8x32xf32>
    %10 = arith.mulf %9, %6 : vector<8x32xf32>
    %11 = arith.select %8, %6, %10 : vector<8x32xi1>, vector<8x32xf32>
    %c0_7 = arith.constant 0 : index
    %c0_8 = arith.constant 0 : index
    %12 = vector.load %arg4[%c0_7, %c0_8] : memref<32x16xbf16, #tpu.memory_space<vmem>>, vector<32x16xbf16>
    %c0_9 = arith.constant 0 : index
    %c0_10 = arith.constant 0 : index
    %13 = vector.load %arg5[%c0_9, %c0_10] : memref<1x16xf32, #tpu.memory_space<vmem>>, vector<1x16xf32>
    %14 = arith.truncf %11 : vector<8x32xf32> to vector<8x32xbf16>
    %cst_11 = arith.constant dense<0.000000e+00> : vector<8x16xf32>
    %15 = tpu.matmul %14, %12, %cst_11 {dimension_numbers = #tpu.dot_dimension_numbers<[1], [0], [0], [1], [0, 0, 1, 1], [], []>} : vector<8x32xbf16>, vector<32x16xbf16>, vector<8x16xf32> -> vector<8x16xf32>
    %16 = vector.broadcast %13 : vector<1x16xf32> to vector<8x16xf32>
    %17 = arith.addf %15, %16 : vector<8x16xf32>
    %cst_12 = arith.constant 0.000000e+00 : f32
    %18 = vector.broadcast %cst_12 : f32 to vector<8x16xf32>
    %19 = arith.cmpf ogt, %17, %18 : vector<8x16xf32>
    %cst_13 = arith.constant 2.000000e-01 : f32
    %20 = vector.broadcast %cst_13 : f32 to vector<8x16xf32>
    %21 = arith.mulf %20, %17 : vector<8x16xf32>
    %22 = arith.select %19, %17, %21 : vector<8x16xi1>, vector<8x16xf32>
    %c0_14 = arith.constant 0 : index
    %c0_15 = arith.constant 0 : index
    %23 = vector.load %arg6[%c0_14, %c0_15] : memref<1x16xf32, #tpu.memory_space<vmem>>, vector<1x16xf32>
    %c0_16 = arith.constant 0 : index
    %c0_17 = arith.constant 0 : index
    %24 = vector.load %arg7[%c0_16, %c0_17] : memref<1x1xf32, #tpu.memory_space<vmem>>, vector<1x1xf32>
    %cst_18 = arith.constant dense<0.000000e+00> : vector<1x8xf32>
    %25 = tpu.matmul %23, %22, %cst_18 {dimension_numbers = #tpu.dot_dimension_numbers<[1], [1], [0], [0], [0, 0, 1, 0], [], []>} : vector<1x16xf32>, vector<8x16xf32>, vector<1x8xf32> -> vector<1x8xf32>
    %26 = vector.broadcast %24 : vector<1x1xf32> to vector<1x8xf32>
    %27 = arith.addf %25, %26 : vector<1x8xf32>
    %cst_19 = arith.constant 0.000000e+00 : f32
    %28 = vector.broadcast %cst_19 : f32 to vector<1x8xf32>
    %29 = arith.subf %28, %27 : vector<1x8xf32>
    %30 = math.exp %29 : vector<1x8xf32>
    %cst_20 = arith.constant 1.000000e+00 : f32
    %31 = vector.broadcast %cst_20 : f32 to vector<1x8xf32>
    %32 = arith.addf %31, %30 : vector<1x8xf32>
    %cst_21 = arith.constant 1.000000e+00 : f32
    %33 = vector.broadcast %cst_21 : f32 to vector<1x8xf32>
    %34 = arith.divf %33, %32 : vector<1x8xf32>
    %35 = vector.shape_cast %34 : vector<1x8xf32> to vector<1x1x8xf32>
    %c0_22 = arith.constant 0 : index
    %c0_23 = arith.constant 0 : index
    %c0_24 = arith.constant 0 : index
    %36 = vector.load %arg8[%c0_22, %c0_23, %c0_24] : memref<1x1x8xf32, #tpu.memory_space<vmem>>, vector<1x1x8xf32>
    tpu.vector_store %arg8[%c0_22, %c0_23, %c0_24], %35 {strides = array<i32>} : memref<1x1x8xf32, #tpu.memory_space<vmem>>, vector<1x1x8xf32>,
    return
  }
  func.func @transform_0(%arg0: i32) -> (i32, i32) {
    %c0_i32 = arith.constant 0 : i32
    %c0_i32_0 = arith.constant 0 : i32
    return %arg0, %c0_i32 : i32, i32
  }
  func.func @transform_1(%arg0: i32) -> (i32, i32) {
    %c0_i32 = arith.constant 0 : i32
    %c0_i32_0 = arith.constant 0 : i32
    %c0_i32_1 = arith.constant 0 : i32
    return %c0_i32, %c0_i32_0 : i32, i32
  }
  func.func @transform_2(%arg0: i32) -> (i32, i32) {
    %c0_i32 = arith.constant 0 : i32
    %c0_i32_0 = arith.constant 0 : i32
    %c0_i32_1 = arith.constant 0 : i32
    return %c0_i32, %c0_i32_0 : i32, i32
  }
  func.func @transform_3(%arg0: i32) -> (i32, i32) {
    %c0_i32 = arith.constant 0 : i32
    %c0_i32_0 = arith.constant 0 : i32
    %c0_i32_1 = arith.constant 0 : i32
    return %c0_i32, %c0_i32_0 : i32, i32
  }
  func.func @transform_4(%arg0: i32) -> (i32, i32) {
    %c0_i32 = arith.constant 0 : i32
    %c0_i32_0 = arith.constant 0 : i32
    %c0_i32_1 = arith.constant 0 : i32
    return %c0_i32, %c0_i32_0 : i32, i32
  }
  func.func @transform_5(%arg0: i32) -> (i32, i32) {
    %c0_i32 = arith.constant 0 : i32
    %c0_i32_0 = arith.constant 0 : i32
    %c0_i32_1 = arith.constant 0 : i32
    return %c0_i32, %c0_i32_0 : i32, i32
  }
  func.func @transform_6(%arg0: i32) -> (i32, i32) {
    %c0_i32 = arith.constant 0 : i32
    %c0_i32_0 = arith.constant 0 : i32
    %c0_i32_1 = arith.constant 0 : i32
    return %c0_i32, %c0_i32_0 : i32, i32
  }
  func.func @transform_7(%arg0: i32) -> (i32, i32, i32) {
    %c0_i32 = arith.constant 0 : i32
    %c0_i32_0 = arith.constant 0 : i32
    %c0_i32_1 = arith.constant 0 : i32
    return %arg0, %c0_i32, %c0_i32_0 : i32, i32, i32
  }
}

</mosaic_0001>

<llo_original>
// kernel: dl_forward.1
$region0: #{dl_forward.1}
  #allocation0 [shape = 'u32[]', space=smem, size = 0x4, offset = 0x4, fixed_abs, tag = 'smem constant byte address 0x4 - core index']
  #allocation1 [shape = 'u32[144,128]{1,0:T(1,128)}', space=vmem, size = 0x12000, scoped, tag = 'internal scratch']
  #allocation2 [shape = 'f32[1,1]{1,0:T(1,128)S(1)}', space=vmem, size = 0x200, scoped, tag = 'scoped memory for dl_forward.1']
  %s0 = inlined_call_operand.vmem [shape: f32[8,64], index: 0, kind: input, shape index: {}]
  %s1 = inlined_call_operand.vmem [shape: bf16[64,32], index: 1, kind: input, shape index: {}]
  %s2 = inlined_call_operand.vmem [shape: f32[1,32], index: 2, kind: input, shape index: {}]
  %s3 = inlined_call_operand.vmem [shape: bf16[32,16], index: 3, kind: input, shape index: {}]
  %s4 = inlined_call_operand.vmem [shape: f32[1,16], index: 4, kind: input, shape index: {}]
  %s5 = inlined_call_operand.vmem [shape: f32[1,16], index: 5, kind: input, shape index: {}]
  %s6 = inlined_call_operand.<no memory space> [shape: f32[1,1], index: 6, kind: input, shape index: {}]
  %s7 = inlined_call_operand.hbm [shape: f32[1,1,8], index: 7, kind: output, shape index: {}]
  %s8 = sld [smem:[#allocation0]]
  $region38: #{dl_forward.1} parent=0
    _
  %s10 = ssub.s32 1, %s8
  %s11 = scalar_select 0, %s10, %s8
  %v12 = vstv %s6
  %13 = vst [vmem:[#allocation2] sm:$0x1] %v12
  $region1: #{dl_forward.1} parent=0
    #allocation3 [shape = 'u8[512]{0}', space=vmem, size = 0x400, scoped, tag = 'output window, operand 0, single buffered']
    #allocation4 [shape = 's32[1]{0}', space=sflag, size = 0x4, scoped, tag = 'scoped memory for dl_forward.1']
    %14 = vsyncpa [#allocation4], 0
    // Predicated region
    $region2: #{dl_forward.1} parent=1 // pred_check
      _
    $region3: #{dl_forward.1} parent=1 // pred_check_branch
      %16 = sbr.rel (0) target = $region5
    $region4: #{dl_forward.1} parent=1 // pred_region
      _
    $region5: #{dl_forward.1} parent=1 // pred_fallthru
      _
    // Predicated region
    $region6: #{dl_forward.1} parent=1 // pred_check
      _
    $region7: #{dl_forward.1} parent=1 // pred_check_branch
      %18 = sbr.rel (0) target = $region9
    $region8: #{dl_forward.1} parent=1 // pred_region
      _
    $region9: #{dl_forward.1} parent=1 // pred_fallthru
      _
    // Predicated region
    $region10: #{dl_forward.1} parent=1 // pred_check
      _
    $region11: #{dl_forward.1} parent=1 // pred_check_branch
      %20 = sbr.rel (0) target = $region13
    $region12: #{dl_forward.1} parent=1 // pred_region
      _
    $region13: #{dl_forward.1} parent=1 // pred_fallthru
      _
    // Predicated region
    $region14: #{dl_forward.1} parent=1 // pred_check
      _
    $region15: #{dl_forward.1} parent=1 // pred_check_branch
      %22 = sbr.rel (0) target = $region17
    $region16: #{dl_forward.1} parent=1 // pred_region
      _
    $region17: #{dl_forward.1} parent=1 // pred_fallthru
      _
    // Predicated region
    $region18: #{dl_forward.1} parent=1 // pred_check
      _
    $region19: #{dl_forward.1} parent=1 // pred_check_branch
      %24 = sbr.rel (0) target = $region21
    $region20: #{dl_forward.1} parent=1 // pred_region
      _
    $region21: #{dl_forward.1} parent=1 // pred_fallthru
      _
    // Predicated region
    $region22: #{dl_forward.1} parent=1 // pred_check
      _
    $region23: #{dl_forward.1} parent=1 // pred_check_branch
      %26 = sbr.rel (0) target = $region25
    $region24: #{dl_forward.1} parent=1 // pred_region
      _
    $region25: #{dl_forward.1} parent=1 // pred_fallthru
      _
    // Predicated region
    $region26: #{dl_forward.1} parent=1 // pred_check
      _
    $region27: #{dl_forward.1} parent=1 // pred_check_branch
      %28 = sbr.rel (0) target = $region29
    $region28: #{dl_forward.1} parent=1 // pred_region
      _
    $region29: #{dl_forward.1} parent=1 // pred_fallthru
      _
    %v30 = vld [vmem:[%s0] sm:$0xff]
    %v31 = vld [vmem:[%s1] sm:$0xf]
    %v32 = vld [vmem:[%s1 + $0x4] sm:$0xf]
    %v33 = vld [vmem:[%s1 + $0x8] sm:$0xf]
    %v34 = vld [vmem:[%s1 + $0xc] sm:$0xf]
    %v35 = vld [vmem:[%s1 + $0x10] sm:$0xf]
    %v36 = vld [vmem:[%s1 + $0x14] sm:$0xf]
    %v37 = vld [vmem:[%s1 + $0x18] sm:$0xf]
    %v38 = vld [vmem:[%s1 + $0x1c] sm:$0xf]
    %v39 = vld [vmem:[%s2] sm:$0x1]
    %v40 = vpack.c.bf16 %v30, %v30
    %v42 = vlaneseq
    %v43 = vshrl.u32 %v42, 7
    %v44 = vsub.s32 0, %v43
    %v45 = vrot.slane %v39, %v44
    %v55 = vunpack.c.l.b16 %v31
    %v56 = vunpack.c.l.b16 %v32
    %v57 = vunpack.c.l.b16 %v33
    %v58 = vunpack.c.l.b16 %v34
    %v59 = vunpack.c.l.b16 %v35
    %v60 = vunpack.c.l.b16 %v36
    %v61 = vunpack.c.l.b16 %v37
    %v62 = vunpack.c.l.b16 %v38
    %v63 = vpack.c.b16 %v56, %v55
    %v64 = vpack.c.b16 %v58, %v57
    %v65 = vpack.c.b16 %v60, %v59
    %v66 = vpack.c.b16 %v62, %v61
    %vm71 = vcmask 523264
    %v73 = vsel %vm71, %v40, 0
    %75 = vmatprep.subr.bf16.mxu0 0
    %76 = vmatpush1.bf16.msra.mxu0 0
    %77 = vmatprep.subr.bf16.mxu0 0
    %78 = vmatpush1.bf16.msra.mxu0 0
    %79 = vmatprep.subr.bf16.mxu0 0
    %80 = vmatpush1.bf16.msra.mxu0 0
    %81 = vmatprep.subr.bf16.mxu0 0
    %82 = vmatpush1.bf16.msra.mxu0 0
    %83 = vmatprep.subr.bf16.mxu0 0
    %84 = vmatpush1.bf16.msra.mxu0 %v66
    %85 = vmatprep.subr.bf16.mxu0 0
    %86 = vmatpush1.bf16.msra.mxu0 %v65
    %87 = vmatprep.subr.bf16.mxu0 0
    %88 = vmatpush1.bf16.msra.mxu0 %v64
    %89 = vmatprep.subr.bf16.mxu0 0
    %90 = vmatpush1.bf16.msra.mxu0 %v63
    %91 = vmatprep.subr.bf16.mxu0 0
    %92 = vmatpush2.bf16.msra.mxu0 0
    %93 = vmatprep.subr.bf16.mxu0 0
    %94 = vmatpush2.bf16.msra.mxu0 0
    %95 = vmatprep.subr.bf16.mxu0 0
    %96 = vmatpush2.bf16.msra.mxu0 0
    %97 = vmatprep.subr.bf16.mxu0 0
    %98 = vmatpush2.bf16.msra.mxu0 0
    %99 = vmatprep.subr.bf16.mxu0 0
    %100 = vmatpush2.bf16.msra.mxu0 0
    %101 = vmatprep.subr.bf16.mxu0 0
    %102 = vmatpush2.bf16.msra.mxu0 0
    %103 = vmatprep.subr.bf16.mxu0 0
    %104 = vmatpush2.bf16.msra.mxu0 0
    %105 = vmatprep.subr.bf16.mxu0 0
    %106 = vmatpush2.bf16.msra.mxu0 0
    %107 = vmatprep.mubr.bf16.mxu0 0
    %108 = vmatmul.mubr.bf16.gmra.mxu0 %v73
    %v109 = vpop.f32.mrf.mxu0
    %v110 = vadd.f32 %v45, %v109
    %v111 = vpop.f32.mrf.mxu0
    %v112 = vpop.f32.mrf.mxu0
    %v113 = vpop.f32.mrf.mxu0
    %114 = vdwg.mxu0
    %vm115 = vcmp.gt.f32.partialorder %v110, 0.0
    %v116 = vmul.f32 %v110, 0.2
    %v117 = vsel %vm115, %v110, %v116
    %v118 = vld [vmem:[%s3] sm:$0xf]
    %v119 = vld [vmem:[%s3 + $0x4] sm:$0xf]
    %v120 = vld [vmem:[%s3 + $0x8] sm:$0xf]
    %v121 = vld [vmem:[%s3 + $0xc] sm:$0xf]
    %v122 = vld [vmem:[%s4] sm:$0x1]
    %v123 = vpack.c.bf16 %v117, %v117
    %v125 = vlaneseq
    %v126 = vshrl.u32 %v125, 7
    %v127 = vsub.s32 0, %v126
    %v128 = vrot.slane %v122, %v127
    %v134 = vunpack.c.l.b16 %v118
    %v135 = vunpack.c.l.b16 %v119
    %v136 = vunpack.c.l.b16 %v120
    %v137 = vunpack.c.l.b16 %v121
    %v138 = vpack.c.b16 %v135, %v134
    %v139 = vpack.c.b16 %v137, %v136
    %vm142 = vcmask 261120
    %v144 = vsel %vm142, %v123, 0
    %146 = vmatprep.subr.bf16.mxu0 0
    %147 = vmatpush1.bf16.msra.mxu0 0
    %148 = vmatprep.subr.bf16.mxu0 0
    %149 = vmatpush1.bf16.msra.mxu0 0
    %150 = vmatprep.subr.bf16.mxu0 0
    %151 = vmatpush1.bf16.msra.mxu0 0
    %152 = vmatprep.subr.bf16.mxu0 0
    %153 = vmatpush1.bf16.msra.mxu0 0
    %154 = vmatprep.subr.bf16.mxu0 0
    %155 = vmatpush1.bf16.msra.mxu0 0
    %156 = vmatprep.subr.bf16.mxu0 0
    %157 = vmatpush1.bf16.msra.mxu0 0
    %158 = vmatprep.subr.bf16.mxu0 0
    %159 = vmatpush1.bf16.msra.mxu0 %v139
    %160 = vmatprep.subr.bf16.mxu0 0
    %161 = vmatpush1.bf16.msra.mxu0 %v138
    %162 = vmatprep.subr.bf16.mxu0 0
    %163 = vmatpush2.bf16.msra.mxu0 0
    %164 = vmatprep.subr.bf16.mxu0 0
    %165 = vmatpush2.bf16.msra.mxu0 0
    %166 = vmatprep.subr.bf16.mxu0 0
    %167 = vmatpush2.bf16.msra.mxu0 0
    %168 = vmatprep.subr.bf16.mxu0 0
    %169 = vmatpush2.bf16.msra.mxu0 0
    %170 = vmatprep.subr.bf16.mxu0 0
    %171 = vmatpush2.bf16.msra.mxu0 0
    %172 = vmatprep.subr.bf16.mxu0 0
    %173 = vmatpush2.bf16.msra.mxu0 0
    %174 = vmatprep.subr.bf16.mxu0 0
    %175 = vmatpush2.bf16.msra.mxu0 0
    %176 = vmatprep.subr.bf16.mxu0 0
    %177 = vmatpush2.bf16.msra.mxu0 0
    %178 = vmatprep.mubr.bf16.mxu0 0
    %179 = vmatmul.mubr.bf16.gmra.mxu0 %v144
    %v180 = vpop.f32.mrf.mxu0
    %v181 = vadd.f32 %v128, %v180
    %v182 = vpop.f32.mrf.mxu0
    %v183 = vpop.f32.mrf.mxu0
    %v184 = vpop.f32.mrf.mxu0
    %185 = vdwg.mxu0
    %vm186 = vcmp.gt.f32.partialorder %v181, 0.0
    %v187 = vmul.f32 %v181, 0.2
    %v188 = vsel %vm186, %v181, %v187
    %v189 = vld [vmem:[%s5] sm:$0x1]
    %v190 = vld [vmem:[#allocation2] sm:$0x1]
    %192 = vset.pattern.permute.xlu0 0
    %193 = vperm.xlu0 %192, %v190
    %v194 = vpop.permute.xlu0 %193
    %v196 = vlaneseq
    %v197 = vshrl.u32 %v196, 7
    %v198 = vsub.s32 0, %v197
    %v199 = vrot.slane %v194, %v198
    %vm200 = vcmask 130048
    %v202 = vsel %vm200, %v189, 0
    %v205 = vsel %vm200, %v188, 0
    %207 = vmatprep.subr.mxu0 0.0
    %208 = vmatpush1.xpose.msra.mxu0 0.0
    %209 = vmatprep.subr.mxu0 0.0
    %210 = vmatpush1.xpose.msra.mxu0 0.0
    %211 = vmatprep.subr.mxu0 0.0
    %212 = vmatpush1.xpose.msra.mxu0 0.0
    %213 = vmatprep.subr.mxu0 0.0
    %214 = vmatpush1.xpose.msra.mxu0 0.0
    %215 = vmatprep.subr.mxu0 0.0
    %216 = vmatpush1.xpose.msra.mxu0 0.0
    %217 = vmatprep.subr.mxu0 0.0
    %218 = vmatpush1.xpose.msra.mxu0 0.0
    %219 = vmatprep.subr.mxu0 0.0
    %220 = vmatpush1.xpose.msra.mxu0 0.0
    %221 = vmatprep.subr.mxu0 0.0
    %222 = vmatpush1.xpose.msra.mxu0 0.0
    %223 = vmatprep.subr.mxu0 0.0
    %224 = vmatpush1.xpose.msra.mxu0 0.0
    %225 = vmatprep.subr.mxu0 0.0
    %226 = vmatpush1.xpose.msra.mxu0 0.0
    %227 = vmatprep.subr.mxu0 0.0
    %228 = vmatpush1.xpose.msra.mxu0 0.0
    %229 = vmatprep.subr.mxu0 0.0
    %230 = vmatpush1.xpose.msra.mxu0 0.0
    %231 = vmatprep.subr.mxu0 0.0
    %232 = vmatpush1.xpose.msra.mxu0 0.0
    %233 = vmatprep.subr.mxu0 0.0
    %234 = vmatpush1.xpose.msra.mxu0 0.0
    %235 = vmatprep.subr.mxu0 0.0
    %236 = vmatpush1.xpose.msra.mxu0 0.0
    %237 = vmatprep.subr.mxu0 0.0
    %238 = vmatpush1.xpose.msra.mxu0 %v205
    %239 = vmatprep.subr.mxu0 0.0
    %240 = vmatpush2.xpose.msra.mxu0 0.0
    %241 = vmatprep.subr.mxu0 0.0
    %242 = vmatpush2.xpose.msra.mxu0 0.0
    %243 = vmatprep.subr.mxu0 0.0
    %244 = vmatpush2.xpose.msra.mxu0 0.0
    %245 = vmatprep.subr.mxu0 0.0
    %246 = vmatpush2.xpose.msra.mxu0 0.0
    %247 = vmatprep.subr.mxu0 0.0
    %248 = vmatpush2.xpose.msra.mxu0 0.0
    %249 = vmatprep.subr.mxu0 0.0
    %250 = vmatpush2.xpose.msra.mxu0 0.0
    %251 = vmatprep.subr.mxu0 0.0
    %252 = vmatpush2.xpose.msra.mxu0 0.0
    %253 = vmatprep.subr.mxu0 0.0
    %254 = vmatpush2.xpose.msra.mxu0 0.0
    %255 = vmatprep.subr.mxu0 0.0
    %256 = vmatpush2.xpose.msra.mxu0 0.0
    %257 = vmatprep.subr.mxu0 0.0
    %258 = vmatpush2.xpose.msra.mxu0 0.0
    %259 = vmatprep.subr.mxu0 0.0
    %260 = vmatpush2.xpose.msra.mxu0 0.0
    %261 = vmatprep.subr.mxu0 0.0
    %262 = vmatpush2.xpose.msra.mxu0 0.0
    %263 = vmatprep.subr.mxu0 0.0
    %264 = vmatpush2.xpose.msra.mxu0 0.0
    %265 = vmatprep.subr.mxu0 0.0
    %266 = vmatpush2.xpose.msra.mxu0 0.0
    %267 = vmatprep.subr.mxu0 0.0
    %268 = vmatpush2.xpose.msra.mxu0 0.0
    %269 = vmatprep.subr.mxu0 0.0
    %270 = vmatpush2.xpose.msra.mxu0 0.0
    %271 = vmatprep.mubr.f32.mxu0 0.0
    %272 = vmatmul.mubr.f32.gmra.mxu0 %v202
    %v273 = vpop.f32.mrf.mxu0
    %v274 = vadd.f32 %v199, %v273
    %v275 = vpop.f32.mrf.mxu0
    %276 = vdwg.mxu0
    %v277 = vsub.f32 0.0, %v274
    %v278 = vmul.f32 %v277, 1.442695
    %v279 = vpow.pop %v278
    %v280 = vadd.f32 %v279, 1.0
    %v281 = vrcp.pop %v280
    %v282 = vmul.f32 1.0, %v281
    %vm283 = vcmask 57344
    %284 = vst.msk [vmem:[#allocation3] sm:$0x1] %vm283, %v282
    // Predicated region
    $region30: #{dl_forward.1} parent=1 // pred_check
      _
    $region31: #{dl_forward.1} parent=1 // pred_check_branch
      %286 = sbr.rel (0) target = $region33
    $region32: #{dl_forward.1} parent=1 // pred_region
      %s288 = ssub.s32 16, 16
      %289 = vsyncadd [#allocation4], %s288
      %s291 = sshll.u32 [#allocation3], 4
      %s292 = int_to_ptr.vmem [resolvable:$true] %s291
      %294 = dma.vmem_to_hbm [thread:$0]  %s292, 16, %s7, [#allocation4]
    $region33: #{dl_forward.1} parent=1 // pred_fallthru
      _
    // Predicated region
    $region34: #{dl_forward.1} parent=1 // pred_check
      _
    $region35: #{dl_forward.1} parent=1 // pred_check_branch
      %296 = sbr.rel (0) target = $region37
    $region36: #{dl_forward.1} parent=1 // pred_region
      %297 = dma.done [#allocation4], 16
    $region37: #{dl_forward.1} parent=1 // pred_fallthru
      _
    %298 = vsyncpa [#allocation4], 1

</llo_original>
